<compile_context>
chip_gen: v7x
topology: tpu7x:2x2x1
jax: 0.10.0
libtpu: 0.0.40
codegen_flags: <defaults>
</compile_context>

<pallas_src>
import jax
import jax.numpy as jnp
from jax.experimental import pallas as pl
from jax.experimental.pallas import tpu as pltpu

LANES = 128
SUBLANES = 8


def _mape_kernel(p_ref, l_ref, sum_ref, cnt_ref):
    s = pl.program_id(1)

    # Output blocks are resident across the reduction axis; zero them once.
    @pl.when(s == 0)
    def _():
        sum_ref[...] = jnp.zeros_like(sum_ref)
        cnt_ref[...] = jnp.zeros_like(cnt_ref)

    p = p_ref[...].astype(jnp.float32)
    l = l_ref[...].astype(jnp.float32)
    mask = l != 0.0
    # Safe divide: masked-out lanes contribute exactly 0 (no inf/nan pollution),
    # matching torch's `distance[mask]` selection before the mean.
    dist = jnp.where(mask, jnp.abs(p - l) / jnp.where(mask, jnp.abs(l), 1.0), 0.0)

    tm = dist.shape[0]
    # VPU-only partial reduction: fold the (tm,128) tile into the resident
    # (8,128) accumulators (vreg-wise adds; this reshape does not cross vreg
    # tile boundaries).  Cross-lane XLU reductions are deferred to the wrapper.
    sum_ref[0] += jnp.sum(dist.reshape(tm // SUBLANES, SUBLANES, LANES), axis=0)
    cnt_ref[0] += jnp.sum(
        mask.astype(jnp.float32).reshape(tm // SUBLANES, SUBLANES, LANES), axis=0
    )


def mape_loss(preds: jax.Array, labels: jax.Array, *, tm: int = 1024) -> jax.Array:
    assert preds.shape == labels.shape
    assert tm % SUBLANES == 0
    total = preds.size

    p_flat = preds.reshape(-1)
    l_flat = labels.reshape(-1)

    # Row-tile size: never taller than the (sublane-rounded) input.
    rows_needed = pl.cdiv(total, LANES)
    tm_eff = min(tm, pl.cdiv(rows_needed, SUBLANES) * SUBLANES)

    total_blocks = pl.cdiv(rows_needed, tm_eff)
    # Split the reduction into 2 per-TensorCore partials when the block count
    # allows it (exploits v7x megacore; harmless on 1-TC chips).
    n_par = 2 if (total_blocks >= 2 and total_blocks % 2 == 0) else 1
    steps = total_blocks // n_par

    padded_rows = total_blocks * tm_eff
    pad = padded_rows * LANES - total
    if pad:
        # Padded labels are 0 -> masked out -> contribute nothing.
        p_flat = jnp.pad(p_flat, (0, pad))
        l_flat = jnp.pad(l_flat, (0, pad))
    p2 = p_flat.reshape(padded_rows, LANES)
    l2 = l_flat.reshape(padded_rows, LANES)

    in_map = lambda c, s: (c * steps + s, 0)
    out_map = lambda c, s: (c, 0, 0)

    sum_out, cnt_out = pl.pallas_call(
        _mape_kernel,
        out_shape=(
            jax.ShapeDtypeStruct((n_par, SUBLANES, LANES), jnp.float32),
            jax.ShapeDtypeStruct((n_par, SUBLANES, LANES), jnp.float32),
        ),
        grid_spec=pltpu.PrefetchScalarGridSpec(
            num_scalar_prefetch=0,
            grid=(n_par, steps),
            in_specs=[
                pl.BlockSpec((tm_eff, LANES), in_map),
                pl.BlockSpec((tm_eff, LANES), in_map),
            ],
            out_specs=(
                pl.BlockSpec((1, SUBLANES, LANES), out_map),
                pl.BlockSpec((1, SUBLANES, LANES), out_map),
            ),
        ),
        compiler_params=pltpu.CompilerParams(
            dimension_semantics=("parallel", "arbitrary"),
        ),
    )(p2, l2)

    # Tiny final cross-lane reduction + divide outside the kernel.
    # If every label is zero this is 0/0 = nan, matching torch's empty mean.
    return jnp.sum(sum_out) / jnp.sum(cnt_out)


def mape_loss_ref(preds, labels):
    mask = labels != 0
    dist = jnp.where(
        mask, jnp.abs(preds - labels) / jnp.where(mask, jnp.abs(labels), 1.0), 0.0
    )
    return jnp.sum(dist) / jnp.sum(mask.astype(jnp.float32))


if __name__ == "__main__":
    key = jax.random.PRNGKey(0)
    kp, kl, kz = jax.random.split(key, 3)

    shape = (2, 4, 16, 16)  # B, C, H, W  -> 2048 elements = 16 rows x 128 lanes
    preds = jax.random.normal(kp, shape, dtype=jnp.float32)
    labels = jax.random.normal(kl, shape, dtype=jnp.float32)
    # Zero out ~25% of the labels to exercise the mask path.
    zero_mask = jax.random.uniform(kz, shape) < 0.25
    labels = jnp.where(zero_mask, 0.0, labels)

    loss = mape_loss(preds, labels)
    jax.block_until_ready(loss)

    ref = mape_loss_ref(preds.astype(jnp.float32), labels.astype(jnp.float32))
    assert jnp.allclose(loss, ref, rtol=1e-5, atol=1e-6), (loss, ref)

    print("KERNEL_OK")
</pallas_src>

<mosaic_0001>
module attributes {stable_mosaic.version = 11 : i64} {
  func.func @_mape_kernel(%arg0: i32, %arg1: i32, %arg2: memref<16x128xf32, #tpu.memory_space<vmem>>, %arg3: memref<16x128xf32, #tpu.memory_space<vmem>>, %arg4: memref<1x8x128xf32, #tpu.memory_space<vmem>>, %arg5: memref<1x8x128xf32, #tpu.memory_space<vmem>>) attributes {dimension_semantics = [#tpu.dimension_semantics<parallel>, #tpu.dimension_semantics<arbitrary>], iteration_bounds = array<i64: 1, 1>, scalar_prefetch = 0 : i64, scratch_operands = 0 : i64, tpu.core_type = #tpu.core_type<tc>, window_params = [{transform_indices = @transform_0, window_bounds = array<i64: 16, 128>}, {transform_indices = @transform_1, window_bounds = array<i64: 16, 128>}, {transform_indices = @transform_2, window_bounds = array<i64: 1, 8, 128>}, {transform_indices = @transform_3, window_bounds = array<i64: 1, 8, 128>}]} {
    %c0_i32 = arith.constant 0 : i32
    %0 = arith.cmpi eq, %arg1, %c0_i32 : i32
    %1 = arith.extui %0 : i1 to i32
    %c0_i32_0 = arith.constant 0 : i32
    %2 = arith.cmpi ne, %1, %c0_i32_0 : i32
    scf.if %2 {
      %cst_20 = arith.constant 0.000000e+00 : f32
      %33 = vector.broadcast %cst_20 : f32 to vector<1x8x128xf32>
      %c0_21 = arith.constant 0 : index
      %c0_22 = arith.constant 0 : index
      %c0_23 = arith.constant 0 : index
      %34 = vector.load %arg4[%c0_21, %c0_22, %c0_23] : memref<1x8x128xf32, #tpu.memory_space<vmem>>, vector<1x8x128xf32>
      tpu.vector_store %arg4[%c0_21, %c0_22, %c0_23], %33 {strides = array<i32>} : memref<1x8x128xf32, #tpu.memory_space<vmem>>, vector<1x8x128xf32>,
      %cst_24 = arith.constant 0.000000e+00 : f32
      %35 = vector.broadcast %cst_24 : f32 to vector<1x8x128xf32>
      %c0_25 = arith.constant 0 : index
      %c0_26 = arith.constant 0 : index
      %c0_27 = arith.constant 0 : index
      %36 = vector.load %arg5[%c0_25, %c0_26, %c0_27] : memref<1x8x128xf32, #tpu.memory_space<vmem>>, vector<1x8x128xf32>
      tpu.vector_store %arg5[%c0_25, %c0_26, %c0_27], %35 {strides = array<i32>} : memref<1x8x128xf32, #tpu.memory_space<vmem>>, vector<1x8x128xf32>,
    } else {
    }
    %c0 = arith.constant 0 : index
    %c0_1 = arith.constant 0 : index
    %3 = vector.load %arg2[%c0, %c0_1] : memref<16x128xf32, #tpu.memory_space<vmem>>, vector<16x128xf32>
    %c0_2 = arith.constant 0 : index
    %c0_3 = arith.constant 0 : index
    %4 = vector.load %arg3[%c0_2, %c0_3] : memref<16x128xf32, #tpu.memory_space<vmem>>, vector<16x128xf32>
    %cst = arith.constant 0.000000e+00 : f32
    %5 = vector.broadcast %cst : f32 to vector<16x128xf32>
    %6 = arith.cmpf one, %4, %5 : vector<16x128xf32>
    %7 = arith.subf %3, %4 : vector<16x128xf32>
    %8 = math.absf %7 : vector<16x128xf32>
    %9 = math.absf %4 : vector<16x128xf32>
    %cst_4 = arith.constant 1.000000e+00 : f32
    %10 = vector.broadcast %cst_4 : f32 to vector<16x128xf32>
    %11 = arith.select %6, %9, %10 : vector<16x128xi1>, vector<16x128xf32>
    %12 = arith.divf %8, %11 : vector<16x128xf32>
    %cst_5 = arith.constant 0.000000e+00 : f32
    %13 = vector.broadcast %cst_5 : f32 to vector<16x128xf32>
    %14 = arith.select %6, %12, %13 : vector<16x128xi1>, vector<16x128xf32>
    %c0_6 = arith.constant 0 : index
    %c0_7 = arith.constant 0 : index
    %c0_8 = arith.constant 0 : index
    %15 = vector.load %arg4[%c0_6, %c0_7, %c0_8] : memref<1x8x128xf32, #tpu.memory_space<vmem>>, vector<1x8x128xf32>
    %16 = vector.shape_cast %15 : vector<1x8x128xf32> to vector<8x128xf32>
    %17 = vector.shape_cast %14 : vector<16x128xf32> to vector<2x8x128xf32>
    %cst_9 = arith.constant dense<0.000000e+00> : vector<8x128xf32>
    %18 = vector.multi_reduction <add>, %17, %cst_9 [0] : vector<2x8x128xf32> to vector<8x128xf32>
    %19 = arith.addf %16, %18 : vector<8x128xf32>
    %c0_10 = arith.constant 0 : index
    %c0_11 = arith.constant 0 : index
    %c0_12 = arith.constant 0 : index
    %20 = vector.load %arg4[%c0_10, %c0_11, %c0_12] : memref<1x8x128xf32, #tpu.memory_space<vmem>>, vector<1x8x128xf32>
    %21 = vector.shape_cast %20 : vector<1x8x128xf32> to vector<8x128xf32>
    %22 = vector.shape_cast %19 : vector<8x128xf32> to vector<1x8x128xf32>
    tpu.vector_store %arg4[%c0_10, %c0_11, %c0_12], %22 {strides = array<i32>} : memref<1x8x128xf32, #tpu.memory_space<vmem>>, vector<1x8x128xf32>,
    %c0_13 = arith.constant 0 : index
    %c0_14 = arith.constant 0 : index
    %c0_15 = arith.constant 0 : index
    %23 = vector.load %arg5[%c0_13, %c0_14, %c0_15] : memref<1x8x128xf32, #tpu.memory_space<vmem>>, vector<1x8x128xf32>
    %24 = vector.shape_cast %23 : vector<1x8x128xf32> to vector<8x128xf32>
    %25 = arith.extui %6 : vector<16x128xi1> to vector<16x128xi32>
    %26 = arith.sitofp %25 : vector<16x128xi32> to vector<16x128xf32>
    %27 = vector.shape_cast %26 : vector<16x128xf32> to vector<2x8x128xf32>
    %cst_16 = arith.constant dense<0.000000e+00> : vector<8x128xf32>
    %28 = vector.multi_reduction <add>, %27, %cst_16 [0] : vector<2x8x128xf32> to vector<8x128xf32>
    %29 = arith.addf %24, %28 : vector<8x128xf32>
    %c0_17 = arith.constant 0 : index
    %c0_18 = arith.constant 0 : index
    %c0_19 = arith.constant 0 : index
    %30 = vector.load %arg5[%c0_17, %c0_18, %c0_19] : memref<1x8x128xf32, #tpu.memory_space<vmem>>, vector<1x8x128xf32>
    %31 = vector.shape_cast %30 : vector<1x8x128xf32> to vector<8x128xf32>
    %32 = vector.shape_cast %29 : vector<8x128xf32> to vector<1x8x128xf32>
    tpu.vector_store %arg5[%c0_17, %c0_18, %c0_19], %32 {strides = array<i32>} : memref<1x8x128xf32, #tpu.memory_space<vmem>>, vector<1x8x128xf32>,
    return
  }
  func.func @transform_0(%arg0: i32, %arg1: i32) -> (i32, i32) {
    %c1_i32 = arith.constant 1 : i32
    %0 = arith.muli %arg0, %c1_i32 : i32
    %1 = arith.addi %0, %arg1 : i32
    %c0_i32 = arith.constant 0 : i32
    %c0_i32_0 = arith.constant 0 : i32
    return %1, %c0_i32 : i32, i32
  }
  func.func @transform_1(%arg0: i32, %arg1: i32) -> (i32, i32) {
    %c1_i32 = arith.constant 1 : i32
    %0 = arith.muli %arg0, %c1_i32 : i32
    %1 = arith.addi %0, %arg1 : i32
    %c0_i32 = arith.constant 0 : i32
    %c0_i32_0 = arith.constant 0 : i32
    return %1, %c0_i32 : i32, i32
  }
  func.func @transform_2(%arg0: i32, %arg1: i32) -> (i32, i32, i32) {
    %c0_i32 = arith.constant 0 : i32
    %c0_i32_0 = arith.constant 0 : i32
    %c0_i32_1 = arith.constant 0 : i32
    return %arg0, %c0_i32, %c0_i32_0 : i32, i32, i32
  }
  func.func @transform_3(%arg0: i32, %arg1: i32) -> (i32, i32, i32) {
    %c0_i32 = arith.constant 0 : i32
    %c0_i32_0 = arith.constant 0 : i32
    %c0_i32_1 = arith.constant 0 : i32
    return %arg0, %c0_i32, %c0_i32_0 : i32, i32, i32
  }
}

</mosaic_0001>

<llo_original>
// kernel: tpu_custom_call.1
$region0: #{tpu_custom_call.1}
  #allocation0 [shape = 'u32[]', space=smem, size = 0x4, offset = 0x4, fixed_abs, tag = 'smem constant byte address 0x4 - core index']
  #allocation1 [shape = 'u32[144,128]{1,0:T(1,128)}', space=vmem, size = 0x12000, scoped, tag = 'internal scratch']
  %s0 = inlined_call_operand.hbm [shape: f32[16,128], index: 0, kind: input, shape index: {}]
  %s1 = inlined_call_operand.hbm [shape: f32[16,128], index: 1, kind: input, shape index: {}]
  %s2 = inlined_call_operand.hbm [shape: f32[1,8,128], index: 2, kind: output, shape index: {0}]
  %s3 = inlined_call_operand.hbm [shape: f32[1,8,128], index: 3, kind: output, shape index: {1}]
  %4 = xla_tuple %s2, %s3
  %s5 = sld [smem:[#allocation0]]
  $region38: #{tpu_custom_call.1} parent=0
    _
  %s7 = ssub.s32 1, %s5
  %s8 = scalar_select 0, %s7, %s5
  $region1: #{tpu_custom_call.1} parent=0
    #allocation2 [shape = 'u8[8192]{0}', space=vmem, size = 0x2000, scoped, tag = 'input window, operand 0, single buffered']
    #allocation3 [shape = 's32[1]{0}', space=sflag, size = 0x4, scoped, tag = 'scoped memory for tpu_custom_call.1']
    #allocation4 [shape = 's32[1]{0}', space=sflag, size = 0x4, scoped, tag = 'scoped memory for tpu_custom_call.1']
    #allocation5 [shape = 'u8[8192]{0}', space=vmem, size = 0x2000, scoped, tag = 'input window, operand 1, single buffered']
    #allocation6 [shape = 's32[1]{0}', space=sflag, size = 0x4, scoped, tag = 'scoped memory for tpu_custom_call.1']
    #allocation7 [shape = 'u8[4096]{0}', space=vmem, size = 0x1000, scoped, tag = 'output window, operand 0, single buffered']
    #allocation8 [shape = 'u8[4096]{0}', space=vmem, size = 0x1000, scoped, tag = 'output window, operand 1, single buffered']
    #allocation9 [shape = 's32[1]{0}', space=sflag, size = 0x4, scoped, tag = 'scoped memory for tpu_custom_call.1']
    %9 = vsyncpa [#allocation3], 0
    %10 = vsyncpa [#allocation6], 0
    %11 = vsyncpa [#allocation4], 0
    %12 = vsyncpa [#allocation9], 0
    // Predicated region
    $region2: #{tpu_custom_call.1} parent=1 // pred_check
      _
    $region3: #{tpu_custom_call.1} parent=1 // pred_check_branch
      %14 = sbr.rel (0) target = $region5
    $region4: #{tpu_custom_call.1} parent=1 // pred_region
      %s15 = sadd.s32 0, 0
      %s16 = smul.u32 2, %s15
      %s18 = ssub.s32 256, 256
      %19 = vsyncadd [#allocation3], %s18
      %s20 = smul.addr %s16, 128
      %s21 = scalar_lea.hbm %s0, %s20
      %s22 = sshll.u32 [#allocation2], 4
      %s23 = int_to_ptr.vmem [resolvable:$true] %s22
      %28 = dma.hbm_to_vmem [thread:$0]  %s21, 256, %s23, [#allocation3], 128, 128, 8
    $region5: #{tpu_custom_call.1} parent=1 // pred_fallthru
      _
    // Predicated region
    $region6: #{tpu_custom_call.1} parent=1 // pred_check
      _
    $region7: #{tpu_custom_call.1} parent=1 // pred_check_branch
      %30 = sbr.rel (0) target = $region9
    $region8: #{tpu_custom_call.1} parent=1 // pred_region
      %s31 = sadd.s32 0, 0
      %s32 = smul.u32 2, %s31
      %s34 = ssub.s32 256, 256
      %35 = vsyncadd [#allocation6], %s34
      %s36 = smul.addr %s32, 128
      %s37 = scalar_lea.hbm %s1, %s36
      %s38 = sshll.u32 [#allocation5], 4
      %s39 = int_to_ptr.vmem [resolvable:$true] %s38
      %44 = dma.hbm_to_vmem [thread:$0]  %s37, 256, %s39, [#allocation6], 128, 128, 8
    $region9: #{tpu_custom_call.1} parent=1 // pred_fallthru
      _
    // Predicated region
    $region10: #{tpu_custom_call.1} parent=1 // pred_check
      _
    $region11: #{tpu_custom_call.1} parent=1 // pred_check_branch
      %46 = sbr.rel (0) target = $region13
    $region12: #{tpu_custom_call.1} parent=1 // pred_region
      %47 = dma.done [#allocation3], 256
    $region13: #{tpu_custom_call.1} parent=1 // pred_fallthru
      _
    // Predicated region
    $region14: #{tpu_custom_call.1} parent=1 // pred_check
      _
    $region15: #{tpu_custom_call.1} parent=1 // pred_check_branch
      %49 = sbr.rel (0) target = $region17
    $region16: #{tpu_custom_call.1} parent=1 // pred_region
      %50 = dma.done [#allocation6], 256
    $region17: #{tpu_custom_call.1} parent=1 // pred_fallthru
      _
    %s51 = sadd.s32 0, 0
    %s52 = smul.u32 2, %s51
    %s53 = sadd.s32 0, 0
    %s54 = smul.u32 2, %s53
    %p55 = scmp.eq.s32.totalorder 0, 0
    // Predicated region
    $region18: #{tpu_custom_call.1} parent=1 // pred_check
      %p56 = pneg %p55
    $region19: #{tpu_custom_call.1} parent=1 // pred_check_branch
      %58 = sbr.rel (%p56) target = $region21
    $region20: #{tpu_custom_call.1} parent=1 // pred_region
      %59 = vst [vmem:[#allocation7] sm:$0xff] 0.0
      %60 = vst [vmem:[#allocation8] sm:$0xff] 0.0
    $region21: #{tpu_custom_call.1} parent=1 // pred_fallthru
      _
    %v61 = vld [vmem:[#allocation2] sm:$0xff]
    %v62 = vld [vmem:[#allocation2 + $0x8] sm:$0xff]
    %v63 = vld [vmem:[#allocation5] sm:$0xff]
    %v64 = vld [vmem:[#allocation5 + $0x8] sm:$0xff]
    %vm65 = vcmp.ne.f32.partialorder %v63, 0.0
    %vm66 = vcmp.ne.f32.partialorder %v64, 0.0
    %v67 = vsub.f32 %v61, %v63
    %v68 = vsub.f32 %v62, %v64
    %v69 = vand.u32 2147483647, %v67
    %v70 = vand.u32 2147483647, %v68
    %v71 = vand.u32 2147483647, %v63
    %v72 = vand.u32 2147483647, %v64
    %v73 = vsel %vm65, %v71, 1.0
    %v74 = vsel %vm66, %v72, 1.0
    %v75 = vrcp.pop %v73
    %v76 = vmul.f32 %v69, %v75
    %v77 = vrcp.pop %v74
    %v78 = vmul.f32 %v70, %v77
    %v79 = vsel %vm65, %v76, 0.0
    %v80 = vsel %vm66, %v78, 0.0
    %v81 = vld [vmem:[#allocation7] sm:$0xff]
    %v82 = vadd.f32 %v79, %v80
    %v83 = vadd.f32 %v81, %v82
    %84 = vst [vmem:[#allocation7] sm:$0xff] %v83
    %v85 = vld [vmem:[#allocation8] sm:$0xff]
    %v86 = vsel %vm65, 1, 0
    %v87 = vsel %vm66, 1, 0
    %v88 = vcvt.s32.f32 %v86
    %v89 = vcvt.s32.f32 %v87
    %v90 = vadd.f32 %v88, %v89
    %v91 = vadd.f32 %v85, %v90
    %92 = vst [vmem:[#allocation8] sm:$0xff] %v91
    // Predicated region
    $region22: #{tpu_custom_call.1} parent=1 // pred_check
      _
    $region23: #{tpu_custom_call.1} parent=1 // pred_check_branch
      %94 = sbr.rel (0) target = $region25
    $region24: #{tpu_custom_call.1} parent=1 // pred_region
      %s96 = ssub.s32 128, 128
      %97 = vsyncadd [#allocation4], %s96
      %s99 = sshll.u32 [#allocation7], 4
      %s100 = int_to_ptr.vmem [resolvable:$true] %s99
      %102 = dma.vmem_to_hbm [thread:$0]  %s100, 128, %s2, [#allocation4]
    $region25: #{tpu_custom_call.1} parent=1 // pred_fallthru
      _
    // Predicated region
    $region26: #{tpu_custom_call.1} parent=1 // pred_check
      _
    $region27: #{tpu_custom_call.1} parent=1 // pred_check_branch
      %104 = sbr.rel (0) target = $region29
    $region28: #{tpu_custom_call.1} parent=1 // pred_region
      %s106 = ssub.s32 128, 128
      %107 = vsyncadd [#allocation9], %s106
      %s109 = sshll.u32 [#allocation8], 4
      %s110 = int_to_ptr.vmem [resolvable:$true] %s109
      %112 = dma.vmem_to_hbm [thread:$0]  %s110, 128, %s3, [#allocation9]
    $region29: #{tpu_custom_call.1} parent=1 // pred_fallthru
      _
    // Predicated region
    $region30: #{tpu_custom_call.1} parent=1 // pred_check
      _
    $region31: #{tpu_custom_call.1} parent=1 // pred_check_branch
      %114 = sbr.rel (0) target = $region33
    $region32: #{tpu_custom_call.1} parent=1 // pred_region
      %115 = dma.done [#allocation4], 128
    $region33: #{tpu_custom_call.1} parent=1 // pred_fallthru
      _
    // Predicated region
    $region34: #{tpu_custom_call.1} parent=1 // pred_check
      _
    $region35: #{tpu_custom_call.1} parent=1 // pred_check_branch
      %117 = sbr.rel (0) target = $region37
    $region36: #{tpu_custom_call.1} parent=1 // pred_region
      %118 = dma.done [#allocation9], 128
    $region37: #{tpu_custom_call.1} parent=1 // pred_fallthru
      _
    %119 = vsyncpa [#allocation3], 1
    %120 = vsyncpa [#allocation6], 1
    %121 = vsyncpa [#allocation4], 1
    %122 = vsyncpa [#allocation9], 1

</llo_original>
